<compile_context>
chip_gen: v7x
topology: tpu7x:2x2x1
jax: 0.10.0
libtpu: 0.0.40
codegen_flags: <defaults>
</compile_context>

<pallas_src>
import functools
import math

import jax
import jax.numpy as jnp
from jax import lax
from jax.experimental import pallas as pl
from jax.experimental.pallas import tpu as pltpu


def _rup(x, m):
    return ((x + m - 1) // m) * m


def _padded_row_bytes(b, c, itemsize):
    """Bytes of one sequence row of an (ts, b, c) block after sublane/lane padding."""
    sublane = max(1, 32 // int(itemsize))          # f32 -> 8, bf16 -> 16, int8 -> 32
    return _rup(b, sublane) * _rup(c, 128) * int(itemsize)


def _block_budget_bytes():
    """Per-block byte target, scaled to this generation's physical VMEM
    (v5e/v6e: 128 MiB -> 4 MiB blocks; v7x: 64 MiB per TC -> 2 MiB blocks)."""
    try:
        vmem_phys = int(pltpu.get_tpu_info().vmem_capacity_bytes)
    except Exception:
        vmem_phys = 64 << 20                       # conservative default
    return int(min(4 << 20, max(1 << 20, vmem_phys // 32)))


def _seq_tile(s, b, c, itemsize):
    row_bytes = _padded_row_bytes(b, c, itemsize)
    ts = max(1, _block_budget_bytes() // row_bytes)
    # Never collapse the grid to a single step: keep >= ~4 steps when possible
    # so the software pipeline overlaps DMA with compute and v7x can shard the
    # "parallel" axis over both TensorCores.
    if s >= 4:
        ts = min(ts, max(1, s // 4))
    else:
        ts = min(ts, s)
    if ts >= 8:
        ts = (ts // 8) * 8
    return ts


# -----------------------------------------------------------------------------
# Fused kernel:  out = dropout(x + pe)      (dropout only when apply_dropout)
# -----------------------------------------------------------------------------
def _make_pe_kernel(p, apply_dropout):
    keep_thresh = int(round((1.0 - float(p)) * (1 << 24)))      # 24-bit threshold
    inv_keep = 1.0 / (1.0 - float(p)) if p < 1.0 else 0.0

    def kernel(seed_ref, x_ref, pe_ref, o_ref):
        # x_ref: (TS, B, C); pe_ref: (TS, 1, C) -> size-1 sublane splat over batch.
        y = x_ref[...].astype(jnp.float32) + pe_ref[...]
        if apply_dropout:
            ts, b, c = x_ref.shape
            shp = (ts, b, c)
            # Global element index (counter) for this tile.
            row = lax.broadcasted_iota(jnp.int32, shp, 0)
            bat = lax.broadcasted_iota(jnp.int32, shp, 1)
            lane = lax.broadcasted_iota(jnp.int32, shp, 2)
            base = pl.program_id(0) * (ts * b * c)
            idx = base + (row * b + bat) * c + lane
            # Seed mixed with a large odd constant (golden ratio) before xor.
            seed_u = seed_ref[0].astype(jnp.uint32) * jnp.uint32(0x9E3779B9)
            h = idx.astype(jnp.uint32) ^ seed_u
            # lowbias32-style avalanche mixer (pure VPU ops).
            h = (h ^ (h >> 16)) * jnp.uint32(0x7FEB352D)
            h = (h ^ (h >> 15)) * jnp.uint32(0x846CA68B)
            h = h ^ (h >> 16)
            # Integer threshold compare: keep ~ Bernoulli(1-p).
            keep = (h >> 8) < jnp.uint32(keep_thresh)
            y = y * jnp.where(keep, jnp.float32(inv_keep), jnp.float32(0.0))
        o_ref[...] = y.astype(o_ref.dtype)

    return kernel


# -----------------------------------------------------------------------------
# pallas_call wrapper
# -----------------------------------------------------------------------------
@functools.partial(jax.jit, static_argnames=("p", "apply_dropout"))
def _pe_forward(x, pe_slice, seed, *, p, apply_dropout):
    s, b, c = x.shape
    itemsize = x.dtype.itemsize
    ts = _seq_tile(s, b, c, itemsize)
    grid = (pl.cdiv(s, ts),)

    # Padding-aware, double-buffered footprint -> explicit scoped-VMEM limit.
    x_blk = ts * _padded_row_bytes(b, c, itemsize)
    pe_blk = ts * _padded_row_bytes(1, c, 4)
    footprint = 2 * (2 * x_blk + pe_blk)           # (in + out + pe) double-buffered
    vmem_limit = int(min(64 << 20, max(16 << 20, 2 * footprint + (4 << 20))))

    kernel = _make_pe_kernel(p, apply_dropout)
    return pl.pallas_call(
        kernel,
        out_shape=jax.ShapeDtypeStruct((s, b, c), x.dtype),
        grid_spec=pltpu.PrefetchScalarGridSpec(
            num_scalar_prefetch=1,                  # dropout seed -> SMEM
            grid=grid,
            in_specs=[
                pl.BlockSpec((ts, b, c), lambda i, seed_ref: (i, 0, 0)),
                pl.BlockSpec((ts, 1, c), lambda i, seed_ref: (i, 0, 0)),
            ],
            out_specs=pl.BlockSpec((ts, b, c), lambda i, seed_ref: (i, 0, 0)),
        ),
        compiler_params=pltpu.CompilerParams(
            dimension_semantics=("parallel",),      # v7x: shard rows over 2 TCs
            vmem_limit_bytes=vmem_limit),
    )(seed, x, pe_slice)


# -----------------------------------------------------------------------------
# Module wrapper (mirrors the PyTorch class: buffer built in __init__)
# -----------------------------------------------------------------------------
class PositionalEncoding:
    def __init__(self, input_channels=300, dropout=0.1, max_len=5000):
        self.p = float(dropout)
        c = int(input_channels)
        position = jnp.arange(max_len, dtype=jnp.float32)[:, None]          # (L, 1)
        div_term = jnp.exp(
            jnp.arange(0, c, 2, dtype=jnp.float32)
            * (-math.log(10000.0) / c))                                     # (ceil(C/2),)
        angles = position * div_term                                        # (L, ceil(C/2))
        pe = jnp.zeros((max_len, c), jnp.float32)
        pe = pe.at[:, 0::2].set(jnp.sin(angles))
        pe = pe.at[:, 1::2].set(jnp.cos(angles)[:, : c // 2])               # odd-C safe
        self.pe = pe[:, None, :]                  # (max_len, 1, C): sublane-splat over batch
        self.training = True

    def train(self):
        self.training = True
        return self

    def eval(self):
        self.training = False
        return self

    def __call__(self, x, seed=0):
        # x: (seq_len, batch, channels) — same convention as the torch module.
        s = x.shape[0]
        apply_dropout = self.training and self.p > 0.0
        seed_arr = jnp.asarray([seed], jnp.int32)
        return _pe_forward(x, self.pe[:s], seed_arr,
                           p=self.p, apply_dropout=apply_dropout)


# -----------------------------------------------------------------------------
# Demo / correctness check
# -----------------------------------------------------------------------------
if __name__ == "__main__":
    key = jax.random.PRNGKey(0)
    S, B, C = 16, 4, 128                      # seq, batch, channels (lane-dense C)
    x = jax.random.normal(key, (S, B, C), jnp.float32)

    module = PositionalEncoding(input_channels=C, dropout=0.1, max_len=64)
    ref = x + module.pe[:S]                   # (S,1,C) broadcast over batch

    # Eval mode: dropout is identity — deterministic, check against pure JAX.
    out_eval = jax.block_until_ready(module.eval()(x))
    assert out_eval.shape == (S, B, C)
    assert jnp.allclose(out_eval, ref, atol=1e-6, rtol=1e-6)

    # bf16 activations (HBM-bound kernel -> ~2x fewer bytes); math stays in f32.
    x_bf = x.astype(jnp.bfloat16)
    out_bf = jax.block_until_ready(module.eval()(x_bf))
    assert out_bf.dtype == jnp.bfloat16
    ref_bf = x_bf.astype(jnp.float32) + module.pe[:S]
    assert jnp.allclose(out_bf.astype(jnp.float32), ref_bf, atol=5e-2, rtol=5e-2)

    # Train mode: fused dropout via the in-kernel counter hash.
    out_train = jax.block_until_ready(module.train()(x, seed=123))
    assert out_train.shape == (S, B, C)
    dropped = out_train == 0.0                # TODO(synk): true zeros of x+pe would
    zero_frac = float(jnp.mean(dropped.astype(jnp.float32)))   # count as dropped (p~0)
    assert 0.03 <= zero_frac <= 0.22, f"unexpected dropout rate {zero_frac}"
    kept = ~dropped
    ref_scaled = ref * jnp.float32(1.0 / (1.0 - module.p))
    assert jnp.allclose(jnp.where(kept, out_train, 0.0),
                        jnp.where(kept, ref_scaled, 0.0),
                        atol=1e-5, rtol=1e-5)

    print("KERNEL_OK")
</pallas_src>

<mosaic_0001>
module attributes {stable_mosaic.version = 11 : i64} {
  func.func @kernel(%arg0: i32, %arg1: memref<1xi32, #tpu.memory_space<smem>>, %arg2: memref<4x4x128xf32, #tpu.memory_space<vmem>>, %arg3: memref<4x1x128xf32, #tpu.memory_space<vmem>>, %arg4: memref<4x4x128xf32, #tpu.memory_space<vmem>>) attributes {dimension_semantics = [#tpu.dimension_semantics<parallel>], iteration_bounds = array<i64: 4>, scalar_prefetch = 1 : i64, scratch_operands = 0 : i64, tpu.core_type = #tpu.core_type<tc>, window_params = [{transform_indices = @transform_0, window_bounds = array<i64: 4, 4, 128>}, {transform_indices = @transform_1, window_bounds = array<i64: 4, 1, 128>}, {transform_indices = @transform_2, window_bounds = array<i64: 4, 4, 128>}]} {
    %c0 = arith.constant 0 : index
    %c0_0 = arith.constant 0 : index
    %c0_1 = arith.constant 0 : index
    %0 = vector.load %arg2[%c0, %c0_0, %c0_1] : memref<4x4x128xf32, #tpu.memory_space<vmem>>, vector<4x4x128xf32>
    %c0_2 = arith.constant 0 : index
    %c0_3 = arith.constant 0 : index
    %c0_4 = arith.constant 0 : index
    %1 = vector.load %arg3[%c0_2, %c0_3, %c0_4] : memref<4x1x128xf32, #tpu.memory_space<vmem>>, vector<4x1x128xf32>
    %2 = vector.broadcast %1 : vector<4x1x128xf32> to vector<4x4x128xf32>
    %3 = arith.addf %0, %2 : vector<4x4x128xf32>
    %c0_5 = arith.constant 0 : index
    %c0_6 = arith.constant 0 : index
    %c0_7 = arith.constant 0 : index
    %4 = vector.load %arg4[%c0_5, %c0_6, %c0_7] : memref<4x4x128xf32, #tpu.memory_space<vmem>>, vector<4x4x128xf32>
    tpu.vector_store %arg4[%c0_5, %c0_6, %c0_7], %3 {strides = array<i32>} : memref<4x4x128xf32, #tpu.memory_space<vmem>>, vector<4x4x128xf32>,
    return
  }
  func.func @transform_0(%arg0: i32, %arg1: memref<1xi32, #tpu.memory_space<smem>>) -> (i32, i32, i32) {
    %c0_i32 = arith.constant 0 : i32
    %c0_i32_0 = arith.constant 0 : i32
    %c0_i32_1 = arith.constant 0 : i32
    return %arg0, %c0_i32, %c0_i32_0 : i32, i32, i32
  }
  func.func @transform_1(%arg0: i32, %arg1: memref<1xi32, #tpu.memory_space<smem>>) -> (i32, i32, i32) {
    %c0_i32 = arith.constant 0 : i32
    %c0_i32_0 = arith.constant 0 : i32
    %c0_i32_1 = arith.constant 0 : i32
    return %arg0, %c0_i32, %c0_i32_0 : i32, i32, i32
  }
  func.func @transform_2(%arg0: i32, %arg1: memref<1xi32, #tpu.memory_space<smem>>) -> (i32, i32, i32) {
    %c0_i32 = arith.constant 0 : i32
    %c0_i32_0 = arith.constant 0 : i32
    %c0_i32_1 = arith.constant 0 : i32
    return %arg0, %c0_i32, %c0_i32_0 : i32, i32, i32
  }
}

</mosaic_0001>

<llo_original>
// kernel: _pe_forward.1
$region0: #{_pe_forward.1}
  #allocation0 [shape = 'u32[]', space=smem, size = 0x4, offset = 0x4, fixed_abs, tag = 'smem constant byte address 0x4 - core index']
  #allocation1 [shape = 'u32[144,128]{1,0:T(1,128)}', space=vmem, size = 0x12000, scoped, tag = 'internal scratch']
  #allocation2 [shape = 's32[1]{0}', space=sflag, size = 0x4, scoped, tag = 'scoped memory for _pe_forward.1']
  #allocation3 [shape = 's32[1]{0:T(128)S(6)}', space=smem, size = 0x200, scoped, tag = 'prefetched SMEM operand 0']
  %s0 = inlined_call_operand.<no memory space> [shape: s32[1], index: 0, kind: input, shape index: {}]
  %s1 = inlined_call_operand.hbm [shape: f32[16,4,128], index: 1, kind: input, shape index: {}]
  %s2 = inlined_call_operand.hbm [shape: f32[16,1,128], index: 2, kind: input, shape index: {}]
  %s3 = inlined_call_operand.hbm [shape: f32[16,4,128], index: 3, kind: output, shape index: {}]
  %s4 = sld [smem:[#allocation0]]
  $region49: #{_pe_forward.1} parent=0
    _
  %s6 = ssub.s32 1, %s4
  %s7 = scalar_select 0, %s6, %s4
  %8 = sst [smem:[#allocation3]] %s0
  $region1: #{_pe_forward.1} parent=0
    #allocation4 [shape = 'u8[16384]{0}', space=vmem, size = 0x4000, scoped, tag = 'input window, operand 1']
    #allocation5 [shape = 's32[2]{0}', space=sflag, size = 0x8, scoped, tag = 'scoped memory for _pe_forward.1']
    #allocation6 [shape = 's32[2]{0}', space=sflag, size = 0x8, scoped, tag = 'scoped memory for _pe_forward.1']
    #allocation7 [shape = 'u8[4096]{0}', space=vmem, size = 0x1000, scoped, tag = 'input window, operand 2']
    #allocation8 [shape = 's32[2]{0}', space=sflag, size = 0x8, scoped, tag = 'scoped memory for _pe_forward.1']
    #allocation9 [shape = 'u8[16384]{0}', space=vmem, size = 0x4000, scoped, tag = 'output window, operand 0']
    %9 = vsyncpa [#allocation5], 0
    %s10 = scalar_lea.sflag [#allocation5], 1
    %11 = vsyncpa %s10, 0
    %12 = vsyncpa [#allocation8], 0
    %s13 = scalar_lea.sflag [#allocation8], 1
    %14 = vsyncpa %s13, 0
    %15 = vsyncpa [#allocation6], 0
    %s16 = scalar_lea.sflag [#allocation6], 1
    %17 = vsyncpa %s16, 0
    loop: start=0, step=1, limit=6
    $region2: #{_pe_forward.1} parent=1 // loop_pre_header
      _
    $region3: #{_pe_forward.1} parent=1 // loop_header
      %s19 = sphi 0, %s23
      %p20 = scmp.ge.s32.totalorder %s19, 6
      %s29 = sphi 0, %s31
      %s32 = sphi 0, %s29
      %s33 = sphi 0, %s32
      %s49 = sphi 0, %s33
      %s55 = sphi 0, %s57
      %s58 = sphi 0, %s55
      %s59 = sphi 0, %s58
      %s75 = sphi 0, %s59
      %s81 = sphi 0, %s83
      %s84 = sphi 0, %s81
      %s85 = sphi 0, %s84
      %s101 = sphi 0, %s85
    $region4: #{_pe_forward.1} parent=1 // loop_header_branch
      %22 = sbr.rel (%p20) target = $region8
    $region5: #{_pe_forward.1} parent=1 // loop_body
      %s24 = ssub.s32 %s19, 1
      %s25 = ssub.s32 %s19, 2
      %s26 = sadd.s32 %s19, 1
      %s27 = ssub.s32 %s19, %s26
      %p28 = scmp.eq.s32.totalorder %s27, 0
      %s30 = sadd.s32 %s29, 1
      %s31 = scalar_select %p28, %s29, %s30
      %p34 = pneg %p28
      %p35 = scmp.eq.s32.totalorder %s19, 3
      %p36 = por %p34, %p35
      %p37 = scmp.ne.s32.totalorder %s29, %s32
      %p38 = scmp.eq.s32.totalorder %s19, 0
      %p39 = por %p37, %p38
      %p40 = scmp.ne.s32.totalorder %s29, %s32
      %p41 = scmp.eq.s32.totalorder %s24, 3
      %p42 = por %p40, %p41
      %p43 = scmp.ne.s32.totalorder %s32, %s33
      %p44 = scmp.eq.s32.totalorder %s24, 0
      %p45 = por %p43, %p44
      %p46 = scmp.ne.s32.totalorder %s32, %s33
      %p47 = scmp.eq.s32.totalorder %s25, 3
      %p48 = por %p46, %p47
      %p50 = scmp.ne.s32.totalorder %s33, %s49
      %p51 = scmp.eq.s32.totalorder %s25, 0
      %p52 = por %p50, %p51
      %s53 = ssub.s32 %s19, %s26
      %p54 = scmp.eq.s32.totalorder %s53, 0
      %s56 = sadd.s32 %s55, 1
      %s57 = scalar_select %p54, %s55, %s56
      %p60 = pneg %p54
      %p61 = scmp.eq.s32.totalorder %s19, 3
      %p62 = por %p60, %p61
      %p63 = scmp.ne.s32.totalorder %s55, %s58
      %p64 = scmp.eq.s32.totalorder %s19, 0
      %p65 = por %p63, %p64
      %p66 = scmp.ne.s32.totalorder %s55, %s58
      %p67 = scmp.eq.s32.totalorder %s24, 3
      %p68 = por %p66, %p67
      %p69 = scmp.ne.s32.totalorder %s58, %s59
      %p70 = scmp.eq.s32.totalorder %s24, 0
      %p71 = por %p69, %p70
      %p72 = scmp.ne.s32.totalorder %s58, %s59
      %p73 = scmp.eq.s32.totalorder %s25, 3
      %p74 = por %p72, %p73
      %p76 = scmp.ne.s32.totalorder %s59, %s75
      %p77 = scmp.eq.s32.totalorder %s25, 0
      %p78 = por %p76, %p77
      %s79 = ssub.s32 %s19, %s26
      %p80 = scmp.eq.s32.totalorder %s79, 0
      %s82 = sadd.s32 %s81, 1
      %s83 = scalar_select %p80, %s81, %s82
      %p86 = pneg %p80
      %p87 = scmp.eq.s32.totalorder %s19, 3
      %p88 = por %p86, %p87
      %p89 = scmp.ne.s32.totalorder %s81, %s84
      %p90 = scmp.eq.s32.totalorder %s19, 0
      %p91 = por %p89, %p90
      %p92 = scmp.ne.s32.totalorder %s81, %s84
      %p93 = scmp.eq.s32.totalorder %s24, 3
      %p94 = por %p92, %p93
      %p95 = scmp.ne.s32.totalorder %s84, %s85
      %p96 = scmp.eq.s32.totalorder %s24, 0
      %p97 = por %p95, %p96
      %p98 = scmp.ne.s32.totalorder %s84, %s85
      %p99 = scmp.eq.s32.totalorder %s25, 3
      %p100 = por %p98, %p99
      %p102 = scmp.ne.s32.totalorder %s85, %s101
      %p103 = scmp.eq.s32.totalorder %s25, 0
      %p104 = por %p102, %p103
      %p105 = scmp.le.s32.totalorder 1, %s19
      %p106 = scmp.lt.s32.totalorder %s19, 5
      %p107 = pnand %p105, %p106
      %p108 = pneg %p107
      // Predicated region
      $region9: #{_pe_forward.1} parent=5 // pred_check
        _
      $region10: #{_pe_forward.1} parent=5 // pred_check_branch
        %110 = sbr.rel (%p107) target = $region12
      $region11: #{_pe_forward.1} parent=5 // pred_region
        %s111 = ssub.s32 %s19, 1
      $region12: #{_pe_forward.1} parent=5 // pred_fallthru
        _
      %p112 = scmp.lt.s32.totalorder %s19, 4
      // Predicated region
      $region13: #{_pe_forward.1} parent=5 // pred_check
        %p113 = pneg %p112
      $region14: #{_pe_forward.1} parent=5 // pred_check_branch
        %115 = sbr.rel (%p113) target = $region16
      $region15: #{_pe_forward.1} parent=5 // pred_region
        // Predicated region
        $region17: #{_pe_forward.1} parent=15 // pred_check
          %p116 = pneg %p39
        $region18: #{_pe_forward.1} parent=15 // pred_check_branch
          %118 = sbr.rel (%p116) target = $region20
        $region19: #{_pe_forward.1} parent=15 // pred_region
          %s119 = sand.u32 %s29, 1
          %s120 = scalar_lea.sflag [#allocation5], %s119
          %s121 = sand.u32 %s29, 1
          %s122 = smul.addr %s121, 16
          %s123 = scalar_lea.vmem [#allocation4], %s122
          %s124 = smul.u32 4, %s19
          %s126 = ssub.s32 256, 256
          %127 = vsyncadd %s120, %s126
          %s128 = smul.addr %s124, 64
          %s129 = scalar_lea.hbm %s1, %s128
          %s130 = sshll.u32 %s123, 4
          %s131 = int_to_ptr.vmem [resolvable:$true] %s130
          %136 = dma.hbm_to_vmem [thread:$0]  %s129, 256, %s131, %s120, 64, 64, 4
        $region20: #{_pe_forward.1} parent=15 // pred_fallthru
          _
        // Predicated region
        $region21: #{_pe_forward.1} parent=15 // pred_check
          %p137 = pneg %p65
        $region22: #{_pe_forward.1} parent=15 // pred_check_branch
          %139 = sbr.rel (%p137) target = $region24
        $region23: #{_pe_forward.1} parent=15 // pred_region
          %s140 = sand.u32 %s55, 1
          %s141 = scalar_lea.sflag [#allocation8], %s140
          %s142 = sand.u32 %s55, 1
          %s143 = smul.addr %s142, 4
          %s144 = scalar_lea.vmem [#allocation7], %s143
          %s145 = smul.u32 4, %s19
          %s147 = ssub.s32 64, 64
          %148 = vsyncadd %s141, %s147
          %s149 = smul.addr %s145, 16
          %s150 = scalar_lea.hbm %s2, %s149
          %s151 = sshll.u32 %s144, 4
          %s152 = int_to_ptr.vmem [resolvable:$true] %s151
          %157 = dma.hbm_to_vmem [thread:$0]  %s150, 64, %s152, %s141, 16, 16, 1
        $region24: #{_pe_forward.1} parent=15 // pred_fallthru
          _
      $region16: #{_pe_forward.1} parent=5 // pred_fallthru
        _
      %p158 = scmp.le.s32.totalorder 1, %s19
      %p159 = scmp.lt.s32.totalorder %s19, 5
      %p160 = pnand %p158, %p159
      %p161 = pneg %p160
      // Predicated region
      $region25: #{_pe_forward.1} parent=5 // pred_check
        _
      $region26: #{_pe_forward.1} parent=5 // pred_check_branch
        %163 = sbr.rel (%p160) target = $region28
      $region27: #{_pe_forward.1} parent=5 // pred_region
        %s164 = ssub.s32 %s19, 1
        %s165 = sand.u32 %s32, 1
        %s166 = scalar_lea.sflag [#allocation5], %s165
        %s167 = sand.u32 %s32, 1
        %s168 = smul.addr %s167, 16
        %s169 = scalar_lea.vmem [#allocation4], %s168
        // Predicated region
        $region29: #{_pe_forward.1} parent=27 // pred_check
          %p170 = pneg %p45
        $region30: #{_pe_forward.1} parent=27 // pred_check_branch
          %172 = sbr.rel (%p170) target = $region32
        $region31: #{_pe_forward.1} parent=27 // pred_region
          %173 = dma.done %s166, 256
        $region32: #{_pe_forward.1} parent=27 // pred_fallthru
          _
        %s174 = sand.u32 %s58, 1
        %s175 = scalar_lea.sflag [#allocation8], %s174
        %s176 = sand.u32 %s58, 1
        %s177 = smul.addr %s176, 4
        %s178 = scalar_lea.vmem [#allocation7], %s177
        // Predicated region
        $region33: #{_pe_forward.1} parent=27 // pred_check
          %p179 = pneg %p71
        $region34: #{_pe_forward.1} parent=27 // pred_check_branch
          %181 = sbr.rel (%p179) target = $region36
        $region35: #{_pe_forward.1} parent=27 // pred_region
          %182 = dma.done %s175, 64
        $region36: #{_pe_forward.1} parent=27 // pred_fallthru
          _
        %s183 = sand.u32 %s32, 1
        %s184 = scalar_lea.sflag [#allocation5], %s183
        %s185 = sand.u32 %s32, 1
        %s186 = smul.addr %s185, 16
        %s187 = scalar_lea.vmem [#allocation4], %s186
        %p188 = pneg %p45
        %p189 = pneg %p42
        %s190 = sand.u32 %s58, 1
        %s191 = scalar_lea.sflag [#allocation8], %s190
        %s192 = sand.u32 %s58, 1
        %s193 = smul.addr %s192, 4
        %s194 = scalar_lea.vmem [#allocation7], %s193
        %p195 = pneg %p71
        %p196 = pneg %p68
        %p197 = pneg %p97
        %p198 = pneg %p94
        %s199 = sand.u32 %s84, 1
        %s200 = scalar_lea.sflag [#allocation6], %s199
        %s201 = sand.u32 %s84, 1
        %s202 = smul.addr %s201, 16
        %s203 = scalar_lea.vmem [#allocation9], %s202
        %s204 = smul.u32 4, %s24
        %s205 = smul.u32 4, %s24
        %s206 = smul.u32 4, %s24
        %v207 = vld [vmem:[%s169] sm:$0xf]
        %v208 = vld [vmem:[%s169 + $0x4] sm:$0xf]
        %v209 = vld [vmem:[%s169 + $0x8] sm:$0xf]
        %v210 = vld [vmem:[%s169 + $0xc] sm:$0xf]
        %v211 = vld [vmem:[%s178] sm:$0x1]
        %v212 = vld [vmem:[%s178 + $0x1] sm:$0x1]
        %v213 = vld [vmem:[%s178 + $0x2] sm:$0x1]
        %v214 = vld [vmem:[%s178 + $0x3] sm:$0x1]
        %v219 = vlaneseq
        %v220 = vshrl.u32 %v219, 7
        %v221 = vsub.s32 0, %v220
        %v222 = vrot.slane %v211, %v221
        %v223 = vlaneseq
        %v224 = vshrl.u32 %v223, 7
        %v225 = vsub.s32 0, %v224
        %v226 = vrot.slane %v212, %v225
        %v227 = vlaneseq
        %v228 = vshrl.u32 %v227, 7
        %v229 = vsub.s32 0, %v228
        %v230 = vrot.slane %v213, %v229
        %v231 = vlaneseq
        %v232 = vshrl.u32 %v231, 7
        %v233 = vsub.s32 0, %v232
        %v234 = vrot.slane %v214, %v233
        %v239 = vadd.f32 %v207, %v222
        %v240 = vadd.f32 %v208, %v226
        %v241 = vadd.f32 %v209, %v230
        %v242 = vadd.f32 %v210, %v234
        %243 = vst [vmem:[%s203] sm:$0xf] %v239
        %244 = vst [vmem:[%s203 + $0x4] sm:$0xf] %v240
        %245 = vst [vmem:[%s203 + $0x8] sm:$0xf] %v241
        %246 = vst [vmem:[%s203 + $0xc] sm:$0xf] %v242
        %s247 = sand.u32 %s84, 1
        %s248 = scalar_lea.sflag [#allocation6], %s247
        %s249 = sand.u32 %s84, 1
        %s250 = smul.addr %s249, 16
        %s251 = scalar_lea.vmem [#allocation9], %s250
        // Predicated region
        $region37: #{_pe_forward.1} parent=27 // pred_check
          %p252 = pneg %p94
        $region38: #{_pe_forward.1} parent=27 // pred_check_branch
          %254 = sbr.rel (%p252) target = $region40
        $region39: #{_pe_forward.1} parent=27 // pred_region
          %s255 = smul.u32 4, %s24
          %s257 = ssub.s32 256, 256
          %258 = vsyncadd %s248, %s257
          %s259 = smul.addr %s255, 64
          %s260 = scalar_lea.hbm %s3, %s259
          %s261 = sshll.u32 %s251, 4
          %s262 = int_to_ptr.vmem [resolvable:$true] %s261
          %267 = dma.vmem_to_hbm [thread:$0]  %s262, 256, %s260, %s248, 64, 64, 4
        $region40: #{_pe_forward.1} parent=27 // pred_fallthru
          _
      $region28: #{_pe_forward.1} parent=5 // pred_fallthru
        _
      %p268 = scmp.le.s32.totalorder 2, %s19
      // Predicated region
      $region41: #{_pe_forward.1} parent=5 // pred_check
        %p269 = pneg %p268
      $region42: #{_pe_forward.1} parent=5 // pred_check_branch
        %271 = sbr.rel (%p269) target = $region44
      $region43: #{_pe_forward.1} parent=5 // pred_region
        %s272 = ssub.s32 %s19, 2
        // Predicated region
        $region45: #{_pe_forward.1} parent=43 // pred_check
          %p273 = pneg %p100
        $region46: #{_pe_forward.1} parent=43 // pred_check_branch
          %275 = sbr.rel (%p273) target = $region48
        $region47: #{_pe_forward.1} parent=43 // pred_region
          %s276 = sand.u32 %s85, 1
          %s277 = scalar_lea.sflag [#allocation6], %s276
          %s278 = sand.u32 %s85, 1
          %s279 = smul.addr %s278, 16
          %s280 = scalar_lea.vmem [#allocation9], %s279
          %281 = dma.done %s277, 256
        $region48: #{_pe_forward.1} parent=43 // pred_fallthru
          _
      $region44: #{_pe_forward.1} parent=5 // pred_fallthru
        _
    $region6: #{_pe_forward.1} parent=1 // loop_footer
      %s23 = sadd.s32 1, %s19
    $region7: #{_pe_forward.1} parent=1 // loop_footer_branch
      %18 = sbr.rel target = $region3
    $region8: #{_pe_forward.1} parent=1 // loop_exit
      _
    %282 = vsyncpa [#allocation5], 1
    %s283 = scalar_lea.sflag [#allocation5], 1
    %284 = vsyncpa %s283, 1
    %285 = vsyncpa [#allocation8], 1
    %s286 = scalar_lea.sflag [#allocation8], 1
    %287 = vsyncpa %s286, 1
    %288 = vsyncpa [#allocation6], 1
    %s289 = scalar_lea.sflag [#allocation6], 1
    %290 = vsyncpa %s289, 1

</llo_original>
